<compile_context>
chip_gen: v6e
topology: v6e:2x2x1
jax: 0.10.0
libtpu: 0.0.40
codegen_flags: <defaults>
</compile_context>

<pallas_src>
import functools

import jax
import jax.numpy as jnp
from jax.experimental import pallas as pl
from jax.experimental.pallas import tpu as pltpu

NEG_SLOPE = 0.4                       # LeakyReLU negative_slope from the module
LANE = 128
SUBLANE_BF16 = 16                     # bf16 packs 16 sublanes per vreg
VMEM_LIMIT_BYTES = 32 * 1024 * 1024   # scoped default; safe on v5e/v6e/v7x


def _round_up(x, m):
    return (x + m - 1) // m * m


def _pad_feature_dim(d):
    # 128-granular for small dims; 256-granular once the real dim is >=256 so
    # v6e/v7x 256x256 MXU tiles stay filled (costs at most one extra 128-tile
    # on v5e).  Never pads a <=128 dim up to 256.
    if d <= 128:
        return LANE
    if d < 256:
        return _round_up(d, LANE)
    return _round_up(d, 2 * LANE)


# ---------------------------------------------------------------------------
# Fused Pallas kernel: whole MLP for one batch tile, weights resident in VMEM.
#   refs = (w0, b0, w1, b1, ..., x_ref, o_ref)
#   w_l: (pad_in_l, pad_out_l) bf16, zero-padded, stored as (in, out) == W.T
#   b_l: (1, pad_out_l)        f32, zero-padded
#   x  : (TM, pad_in0)         bf16 batch tile
#   o  : (TM, pad_outL)        f32
# ---------------------------------------------------------------------------
def _fused_mlp_kernel(*refs, num_layers):
    x_ref = refs[2 * num_layers]
    o_ref = refs[2 * num_layers + 1]
    h = x_ref[...]                                      # bf16
    for l in range(num_layers):                         # static unroll
        w = refs[2 * l]
        b = refs[2 * l + 1]
        # bf16 operands, f32 accumulation on the MXU.
        y = jnp.dot(h, w[...], preferred_element_type=jnp.float32) + b[...]
        if l < num_layers - 1:
            h = jnp.where(y >= 0.0, y, NEG_SLOPE * y).astype(jnp.bfloat16)
            # Dropout(p=0.2) is a no-op in eval mode.
        else:
            h = jax.nn.sigmoid(y)                       # f32
    o_ref[...] = h.astype(o_ref.dtype)


def prepare_padded_params(params):
    """Pad each layer to its own lane-dense shape and cast weights to bf16.

    Runs ONCE at parameter-load time so no padding/casting work sits on the
    per-call forward critical path.  Weights stored as (in, out) == W.T.
    """
    padded = []
    for w, b in params:
        k, n = w.shape
        pk, pn = _pad_feature_dim(k), _pad_feature_dim(n)
        w_p = jnp.zeros((pk, pn), jnp.bfloat16).at[:k, :n].set(w.astype(jnp.bfloat16))
        b_p = jnp.zeros((1, pn), jnp.float32).at[0, :n].set(b.astype(jnp.float32))
        padded.append((w_p, b_p))
    return padded


def _estimate_vmem_bytes(tm, pad_dims):
    n_layers = len(pad_dims) - 1
    w_bytes = sum(pad_dims[l] * pad_dims[l + 1] * 2 for l in range(n_layers))  # bf16, single copy
    b_bytes = sum(pad_dims[l + 1] * 4 for l in range(n_layers))
    x_bytes = 2 * tm * pad_dims[0] * 2          # bf16 input tile, double-buffered
    o_bytes = 2 * tm * pad_dims[-1] * 4         # f32 output tile, double-buffered
    act_bytes = 3 * tm * max(pad_dims) * 4      # in-flight f32 intermediates (rough)
    return w_bytes + b_bytes + x_bytes + o_bytes + act_bytes


def autoencoder_forward(x, padded_params, out_dim):
    """Fused forward pass: the whole MLP in one pallas_call."""
    B, inp = x.shape
    num_layers = len(padded_params)
    pad_in = padded_params[0][0].shape[0]
    pad_out = padded_params[-1][0].shape[1]
    pad_dims = [pad_in] + [w_p.shape[1] for w_p, _ in padded_params]

    # --- batch tile selection -----------------------------------------------
    b16 = _round_up(B, SUBLANE_BF16)
    if b16 <= 256:
        tm = b16                                                # single tile
    else:
        # >=2 grid steps so both v7x TensorCores get work; cap tile at 512 rows.
        tm = min(512, _round_up(pl.cdiv(B, 2), SUBLANE_BF16))
    # VMEM budget guard: shrink the batch tile before the working set
    # (resident weights + pipelined streams + intermediates) overflows.
    while tm > SUBLANE_BF16 and _estimate_vmem_bytes(tm, pad_dims) > VMEM_LIMIT_BYTES // 2:
        tm = max(SUBLANE_BF16, _round_up(tm // 2, SUBLANE_BF16))
    # TODO(synk): if even tm==16 overflows (huge feature dims), fall back to a
    # K/N-tiled grid with a pl.when-guarded accumulator instead of whole-layer dots.
    bp = _round_up(B, tm)

    # x is the only per-tile HBM stream: pad it only to pad(inp), cast to bf16.
    x_p = jnp.zeros((bp, pad_in), jnp.bfloat16).at[:B, :inp].set(
        x.astype(jnp.bfloat16))

    # Weights/biases: whole-array VMEM residents (single copy, no per-step DMA,
    # no redundant double buffer).
    resident = pl.BlockSpec(memory_space=pltpu.MemorySpace.VMEM)
    in_specs = []
    flat_inputs = []
    for w_p, b_p in padded_params:
        in_specs += [resident, resident]
        flat_inputs += [w_p, b_p]
    in_specs.append(pl.BlockSpec((tm, pad_in), lambda i: (i, 0)))   # x tile
    flat_inputs.append(x_p)

    out_p = pl.pallas_call(
        functools.partial(_fused_mlp_kernel, num_layers=num_layers),
        out_shape=jax.ShapeDtypeStruct((bp, pad_out), jnp.float32),
        grid=(bp // tm,),
        in_specs=in_specs,
        out_specs=pl.BlockSpec((tm, pad_out), lambda i: (i, 0)),
        compiler_params=pltpu.CompilerParams(
            dimension_semantics=("parallel",),
            vmem_limit_bytes=VMEM_LIMIT_BYTES,
        ),
    )(*flat_inputs)

    # Drop batch / feature padding (padded sigmoid columns would be 0.5).
    return out_p[:B, :out_dim].astype(x.dtype)


# ---------------------------------------------------------------------------
# Parameter init (mirrors init_weights: kaiming_normal_(leaky_relu), bias = 0)
# ---------------------------------------------------------------------------
def init_params(key, inp_size, hidden_dim, out_dim):
    dims = [inp_size] + list(hidden_dim) + [out_dim]
    gain = 2.0 ** 0.5   # kaiming_normal_(a=0, nonlinearity='leaky_relu')
    params = []
    for i in range(len(dims) - 1):
        key, sub = jax.random.split(key)
        fan_in, fan_out = dims[i], dims[i + 1]
        std = gain / (fan_in ** 0.5)
        # stored as (in, out) == W.T of PyTorch's (out, in) layout
        w = jax.random.normal(sub, (fan_in, fan_out), jnp.float32) * std
        b = jnp.zeros((fan_out,), jnp.float32)
        params.append((w, b))
    return params


# pure-JAX f32 reference (module semantics) for correctness checks
def reference_forward(x, params):
    n = len(params)
    for i, (w, b) in enumerate(params):
        y = x @ w + b
        if i == n - 1:
            x = jax.nn.sigmoid(y)
        else:
            x = jnp.where(y >= 0.0, y, NEG_SLOPE * y)
    return x


# TODO(synk): training-mode Dropout(p=0.2) (inverted-dropout masking via
# pltpu.prng_seed + pltpu.prng_random_bits) omitted; eval-mode forward is exact.


if __name__ == "__main__":
    key = jax.random.PRNGKey(0)
    k_param, k_x1, k_x2 = jax.random.split(key, 3)

    inp_size = 32
    hidden_dim = (64, 32)
    out_dim = 16

    params = init_params(k_param, inp_size, hidden_dim, out_dim)
    padded_params = prepare_padded_params(params)     # once, outside the jit

    fwd = jax.jit(autoencoder_forward, static_argnums=2)

    # Small batch: single-tile path.
    x_small = jax.random.normal(k_x1, (8, inp_size), jnp.float32)
    out_small = jax.block_until_ready(fwd(x_small, padded_params, out_dim))
    ref_small = reference_forward(x_small, params)
    assert out_small.shape == (8, out_dim)
    # bf16 matmul path -> looser tolerance vs. the pure-f32 reference.
    assert jnp.allclose(out_small, ref_small, atol=3e-2, rtol=3e-2), (
        float(jnp.max(jnp.abs(out_small - ref_small))))

    # Larger batch: exercises the multi-tile "parallel" grid (>=2 steps).
    x_big = jax.random.normal(k_x2, (300, inp_size), jnp.float32)
    out_big = jax.block_until_ready(fwd(x_big, padded_params, out_dim))
    ref_big = reference_forward(x_big, params)
    assert out_big.shape == (300, out_dim)
    assert jnp.allclose(out_big, ref_big, atol=3e-2, rtol=3e-2), (
        float(jnp.max(jnp.abs(out_big - ref_big))))

    print("KERNEL_OK")
</pallas_src>

<mosaic_0001>
module attributes {stable_mosaic.version = 11 : i64} {
  func.func @_fused_mlp_kernel(%arg0: i32, %arg1: memref<128x128xbf16, #tpu.memory_space<vmem>>, %arg2: memref<1x128xf32, #tpu.memory_space<vmem>>, %arg3: memref<128x128xbf16, #tpu.memory_space<vmem>>, %arg4: memref<1x128xf32, #tpu.memory_space<vmem>>, %arg5: memref<128x128xbf16, #tpu.memory_space<vmem>>, %arg6: memref<1x128xf32, #tpu.memory_space<vmem>>, %arg7: memref<16x128xbf16, #tpu.memory_space<vmem>>, %arg8: memref<16x128xf32, #tpu.memory_space<vmem>>) attributes {dimension_semantics = [#tpu.dimension_semantics<parallel>], iteration_bounds = array<i64: 1>, scalar_prefetch = 0 : i64, scratch_operands = 0 : i64, tpu.core_type = #tpu.core_type<tc>, window_params = [{pipeline_mode = #tpu.pipeline_mode<synchronous>, transform_indices = @transform_0, window_bounds = array<i64: 128, 128>}, {pipeline_mode = #tpu.pipeline_mode<synchronous>, transform_indices = @transform_1, window_bounds = array<i64: 1, 128>}, {pipeline_mode = #tpu.pipeline_mode<synchronous>, transform_indices = @transform_2, window_bounds = array<i64: 128, 128>}, {pipeline_mode = #tpu.pipeline_mode<synchronous>, transform_indices = @transform_3, window_bounds = array<i64: 1, 128>}, {pipeline_mode = #tpu.pipeline_mode<synchronous>, transform_indices = @transform_4, window_bounds = array<i64: 128, 128>}, {pipeline_mode = #tpu.pipeline_mode<synchronous>, transform_indices = @transform_5, window_bounds = array<i64: 1, 128>}, {transform_indices = @transform_6, window_bounds = array<i64: 16, 128>}, {transform_indices = @transform_7, window_bounds = array<i64: 16, 128>}]} {
    %c0 = arith.constant 0 : index
    %c0_0 = arith.constant 0 : index
    %0 = vector.load %arg7[%c0, %c0_0] : memref<16x128xbf16, #tpu.memory_space<vmem>>, vector<16x128xbf16>
    %c0_1 = arith.constant 0 : index
    %c0_2 = arith.constant 0 : index
    %1 = vector.load %arg1[%c0_1, %c0_2] : memref<128x128xbf16, #tpu.memory_space<vmem>>, vector<128x128xbf16>
    %cst = arith.constant dense<0.000000e+00> : vector<16x128xf32>
    %2 = tpu.matmul %0, %1, %cst {dimension_numbers = #tpu.dot_dimension_numbers<[1], [0], [0], [1], [0, 0, 1, 1], [], []>} : vector<16x128xbf16>, vector<128x128xbf16>, vector<16x128xf32> -> vector<16x128xf32>
    %c0_3 = arith.constant 0 : index
    %c0_4 = arith.constant 0 : index
    %3 = vector.load %arg2[%c0_3, %c0_4] : memref<1x128xf32, #tpu.memory_space<vmem>>, vector<1x128xf32>
    %4 = vector.broadcast %3 : vector<1x128xf32> to vector<16x128xf32>
    %5 = arith.addf %2, %4 : vector<16x128xf32>
    %cst_5 = arith.constant 0.000000e+00 : f32
    %6 = vector.broadcast %cst_5 : f32 to vector<16x128xf32>
    %7 = arith.cmpf oge, %5, %6 : vector<16x128xf32>
    %cst_6 = arith.constant 4.000000e-01 : f32
    %8 = vector.broadcast %cst_6 : f32 to vector<16x128xf32>
    %9 = arith.mulf %8, %5 : vector<16x128xf32>
    %10 = arith.select %7, %5, %9 : vector<16x128xi1>, vector<16x128xf32>
    %11 = arith.truncf %10 : vector<16x128xf32> to vector<16x128xbf16>
    %c0_7 = arith.constant 0 : index
    %c0_8 = arith.constant 0 : index
    %12 = vector.load %arg3[%c0_7, %c0_8] : memref<128x128xbf16, #tpu.memory_space<vmem>>, vector<128x128xbf16>
    %cst_9 = arith.constant dense<0.000000e+00> : vector<16x128xf32>
    %13 = tpu.matmul %11, %12, %cst_9 {dimension_numbers = #tpu.dot_dimension_numbers<[1], [0], [0], [1], [0, 0, 1, 1], [], []>} : vector<16x128xbf16>, vector<128x128xbf16>, vector<16x128xf32> -> vector<16x128xf32>
    %c0_10 = arith.constant 0 : index
    %c0_11 = arith.constant 0 : index
    %14 = vector.load %arg4[%c0_10, %c0_11] : memref<1x128xf32, #tpu.memory_space<vmem>>, vector<1x128xf32>
    %15 = vector.broadcast %14 : vector<1x128xf32> to vector<16x128xf32>
    %16 = arith.addf %13, %15 : vector<16x128xf32>
    %cst_12 = arith.constant 0.000000e+00 : f32
    %17 = vector.broadcast %cst_12 : f32 to vector<16x128xf32>
    %18 = arith.cmpf oge, %16, %17 : vector<16x128xf32>
    %cst_13 = arith.constant 4.000000e-01 : f32
    %19 = vector.broadcast %cst_13 : f32 to vector<16x128xf32>
    %20 = arith.mulf %19, %16 : vector<16x128xf32>
    %21 = arith.select %18, %16, %20 : vector<16x128xi1>, vector<16x128xf32>
    %22 = arith.truncf %21 : vector<16x128xf32> to vector<16x128xbf16>
    %c0_14 = arith.constant 0 : index
    %c0_15 = arith.constant 0 : index
    %23 = vector.load %arg5[%c0_14, %c0_15] : memref<128x128xbf16, #tpu.memory_space<vmem>>, vector<128x128xbf16>
    %cst_16 = arith.constant dense<0.000000e+00> : vector<16x128xf32>
    %24 = tpu.matmul %22, %23, %cst_16 {dimension_numbers = #tpu.dot_dimension_numbers<[1], [0], [0], [1], [0, 0, 1, 1], [], []>} : vector<16x128xbf16>, vector<128x128xbf16>, vector<16x128xf32> -> vector<16x128xf32>
    %c0_17 = arith.constant 0 : index
    %c0_18 = arith.constant 0 : index
    %25 = vector.load %arg6[%c0_17, %c0_18] : memref<1x128xf32, #tpu.memory_space<vmem>>, vector<1x128xf32>
    %26 = vector.broadcast %25 : vector<1x128xf32> to vector<16x128xf32>
    %27 = arith.addf %24, %26 : vector<16x128xf32>
    %28 = arith.negf %27 : vector<16x128xf32>
    %29 = math.exp %28 : vector<16x128xf32>
    %cst_19 = arith.constant 1.000000e+00 : f32
    %30 = vector.broadcast %cst_19 : f32 to vector<16x128xf32>
    %31 = arith.addf %30, %29 : vector<16x128xf32>
    %32 = arith.divf %30, %31 : vector<16x128xf32>
    %c0_20 = arith.constant 0 : index
    %c0_21 = arith.constant 0 : index
    %33 = vector.load %arg8[%c0_20, %c0_21] : memref<16x128xf32, #tpu.memory_space<vmem>>, vector<16x128xf32>
    tpu.vector_store %arg8[%c0_20, %c0_21], %32 {strides = array<i32>} : memref<16x128xf32, #tpu.memory_space<vmem>>, vector<16x128xf32>,
    return
  }
  func.func @transform_0(%arg0: i32) -> (i32, i32) {
    %c0_i32 = arith.constant 0 : i32
    %c0_i32_0 = arith.constant 0 : i32
    %c0_i32_1 = arith.constant 0 : i32
    return %c0_i32, %c0_i32_0 : i32, i32
  }
  func.func @transform_1(%arg0: i32) -> (i32, i32) {
    %c0_i32 = arith.constant 0 : i32
    %c0_i32_0 = arith.constant 0 : i32
    %c0_i32_1 = arith.constant 0 : i32
    return %c0_i32, %c0_i32_0 : i32, i32
  }
  func.func @transform_2(%arg0: i32) -> (i32, i32) {
    %c0_i32 = arith.constant 0 : i32
    %c0_i32_0 = arith.constant 0 : i32
    %c0_i32_1 = arith.constant 0 : i32
    return %c0_i32, %c0_i32_0 : i32, i32
  }
  func.func @transform_3(%arg0: i32) -> (i32, i32) {
    %c0_i32 = arith.constant 0 : i32
    %c0_i32_0 = arith.constant 0 : i32
    %c0_i32_1 = arith.constant 0 : i32
    return %c0_i32, %c0_i32_0 : i32, i32
  }
  func.func @transform_4(%arg0: i32) -> (i32, i32) {
    %c0_i32 = arith.constant 0 : i32
    %c0_i32_0 = arith.constant 0 : i32
    %c0_i32_1 = arith.constant 0 : i32
    return %c0_i32, %c0_i32_0 : i32, i32
  }
  func.func @transform_5(%arg0: i32) -> (i32, i32) {
    %c0_i32 = arith.constant 0 : i32
    %c0_i32_0 = arith.constant 0 : i32
    %c0_i32_1 = arith.constant 0 : i32
    return %c0_i32, %c0_i32_0 : i32, i32
  }
  func.func @transform_6(%arg0: i32) -> (i32, i32) {
    %c0_i32 = arith.constant 0 : i32
    %c0_i32_0 = arith.constant 0 : i32
    return %arg0, %c0_i32 : i32, i32
  }
  func.func @transform_7(%arg0: i32) -> (i32, i32) {
    %c0_i32 = arith.constant 0 : i32
    %c0_i32_0 = arith.constant 0 : i32
    return %arg0, %c0_i32 : i32, i32
  }
}

</mosaic_0001>

<llo_original>
// kernel: autoencoder_forward.1
$region0: #{autoencoder_forward.1}
  #allocation0 [shape = 'u32[]', space=smem, size = 0x4, offset = 0x4, fixed_abs, tag = 'smem constant byte address 0x4 - core index']
  #allocation1 [shape = 'u32[144,128]{1,0:T(1,128)}', space=vmem, size = 0x12000, scoped, tag = 'internal scratch']
  %s0 = inlined_call_operand.hbm [shape: bf16[128,128], index: 0, kind: input, shape index: {}]
  %s1 = inlined_call_operand.vmem [shape: f32[1,128], index: 1, kind: input, shape index: {}]
  %s2 = inlined_call_operand.hbm [shape: bf16[128,128], index: 2, kind: input, shape index: {}]
  %s3 = inlined_call_operand.vmem [shape: f32[1,128], index: 3, kind: input, shape index: {}]
  %s4 = inlined_call_operand.hbm [shape: bf16[128,128], index: 4, kind: input, shape index: {}]
  %s5 = inlined_call_operand.vmem [shape: f32[1,128], index: 5, kind: input, shape index: {}]
  %s6 = inlined_call_operand.vmem [shape: bf16[16,128], index: 6, kind: input, shape index: {}]
  %s7 = inlined_call_operand.vmem [shape: f32[16,128], index: 7, kind: output, shape index: {}]
  %s8 = sld [smem:[#allocation0]]
  $region50: #{autoencoder_forward.1} parent=0
    _
  %s10 = ssub.s32 1, %s8
  %s11 = scalar_select 0, %s10, %s8
  $region1: #{autoencoder_forward.1} parent=0
    #allocation2 [shape = 'u8[32768]{0}', space=vmem, size = 0x8000, scoped, tag = 'input window, operand 0, single buffered']
    #allocation3 [shape = 's32[1]{0}', space=sflag, size = 0x4, scoped, tag = 'scoped memory for autoencoder_forward.1']
    #allocation4 [shape = 'u8[32768]{0}', space=vmem, size = 0x8000, scoped, tag = 'input window, operand 2, single buffered']
    #allocation5 [shape = 's32[1]{0}', space=sflag, size = 0x4, scoped, tag = 'scoped memory for autoencoder_forward.1']
    #allocation6 [shape = 'u8[32768]{0}', space=vmem, size = 0x8000, scoped, tag = 'input window, operand 4, single buffered']
    %12 = vsyncpa [#allocation3], 0
    %13 = vsyncpa [#allocation5], 0
    // Predicated region
    $region2: #{autoencoder_forward.1} parent=1 // pred_check
      _
    $region3: #{autoencoder_forward.1} parent=1 // pred_check_branch
      %15 = sbr.rel (0) target = $region5
    $region4: #{autoencoder_forward.1} parent=1 // pred_region
      %s17 = ssub.s32 1024, 1024
      %18 = vsyncadd [#allocation3], %s17
      %s19 = sshll.u32 [#allocation2], 4
      %s20 = int_to_ptr.vmem [resolvable:$true] %s19
      %25 = dma.hbm_to_vmem [thread:$0]  %s0, 1024, %s20, [#allocation3], 64, 64, 4
    $region5: #{autoencoder_forward.1} parent=1 // pred_fallthru
      _
    // Predicated region
    $region6: #{autoencoder_forward.1} parent=1 // pred_check
      _
    $region7: #{autoencoder_forward.1} parent=1 // pred_check_branch
      %27 = sbr.rel (0) target = $region9
    $region8: #{autoencoder_forward.1} parent=1 // pred_region
      _
    $region9: #{autoencoder_forward.1} parent=1 // pred_fallthru
      _
    // Predicated region
    $region10: #{autoencoder_forward.1} parent=1 // pred_check
      _
    $region11: #{autoencoder_forward.1} parent=1 // pred_check_branch
      %29 = sbr.rel (0) target = $region13
    $region12: #{autoencoder_forward.1} parent=1 // pred_region
      %s31 = ssub.s32 1024, 1024
      %32 = vsyncadd [#allocation5], %s31
      %s33 = sshll.u32 [#allocation4], 4
      %s34 = int_to_ptr.vmem [resolvable:$true] %s33
      %39 = dma.hbm_to_vmem [thread:$0]  %s2, 1024, %s34, [#allocation5], 64, 64, 4
    $region13: #{autoencoder_forward.1} parent=1 // pred_fallthru
      _
    // Predicated region
    $region14: #{autoencoder_forward.1} parent=1 // pred_check
      _
    $region15: #{autoencoder_forward.1} parent=1 // pred_check_branch
      %41 = sbr.rel (0) target = $region17
    $region16: #{autoencoder_forward.1} parent=1 // pred_region
      _
    $region17: #{autoencoder_forward.1} parent=1 // pred_fallthru
      _
    // Predicated region
    $region18: #{autoencoder_forward.1} parent=1 // pred_check
      _
    $region19: #{autoencoder_forward.1} parent=1 // pred_check_branch
      %43 = sbr.rel (0) target = $region21
    $region20: #{autoencoder_forward.1} parent=1 // pred_region
      %s45 = ssub.s32 1024, 1024
      %46 = vsyncadd [#allocation5], %s45
      %s47 = sshll.u32 [#allocation6], 4
      %s48 = int_to_ptr.vmem [resolvable:$true] %s47
      %53 = dma.hbm_to_vmem [thread:$0]  %s4, 1024, %s48, [#allocation5], 64, 64, 4
    $region21: #{autoencoder_forward.1} parent=1 // pred_fallthru
      _
    // Predicated region
    $region22: #{autoencoder_forward.1} parent=1 // pred_check
      _
    $region23: #{autoencoder_forward.1} parent=1 // pred_check_branch
      %55 = sbr.rel (0) target = $region25
    $region24: #{autoencoder_forward.1} parent=1 // pred_region
      _
    $region25: #{autoencoder_forward.1} parent=1 // pred_fallthru
      _
    // Predicated region
    $region26: #{autoencoder_forward.1} parent=1 // pred_check
      _
    $region27: #{autoencoder_forward.1} parent=1 // pred_check_branch
      %57 = sbr.rel (0) target = $region29
    $region28: #{autoencoder_forward.1} parent=1 // pred_region
      _
    $region29: #{autoencoder_forward.1} parent=1 // pred_fallthru
      _
    // Predicated region
    $region30: #{autoencoder_forward.1} parent=1 // pred_check
      _
    $region31: #{autoencoder_forward.1} parent=1 // pred_check_branch
      %59 = sbr.rel (0) target = $region33
    $region32: #{autoencoder_forward.1} parent=1 // pred_region
      %60 = dma.done [#allocation3], 1024
    $region33: #{autoencoder_forward.1} parent=1 // pred_fallthru
      _
    // Predicated region
    $region34: #{autoencoder_forward.1} parent=1 // pred_check
      _
    $region35: #{autoencoder_forward.1} parent=1 // pred_check_branch
      %62 = sbr.rel (0) target = $region37
    $region36: #{autoencoder_forward.1} parent=1 // pred_region
      %63 = dma.done [#allocation5], 1024
    $region37: #{autoencoder_forward.1} parent=1 // pred_fallthru
      _
    // Predicated region
    $region38: #{autoencoder_forward.1} parent=1 // pred_check
      _
    $region39: #{autoencoder_forward.1} parent=1 // pred_check_branch
      %65 = sbr.rel (0) target = $region41
    $region40: #{autoencoder_forward.1} parent=1 // pred_region
      %66 = dma.done [#allocation5], 1024
    $region41: #{autoencoder_forward.1} parent=1 // pred_fallthru
      _
    %v68 = vld [vmem:[%s6] sm:$0xf]
    %v69 = vld [vmem:[%s6 + $0x4] sm:$0xf]
    %v70 = vld [vmem:[#allocation2] sm:$0xf]
    %v71 = vld [vmem:[#allocation2 + $0x4] sm:$0xf]
    %v72 = vld [vmem:[#allocation2 + $0x8] sm:$0xf]
    %v73 = vld [vmem:[#allocation2 + $0xc] sm:$0xf]
    %v74 = vld [vmem:[#allocation2 + $0x10] sm:$0xf]
    %v75 = vld [vmem:[#allocation2 + $0x14] sm:$0xf]
    %v76 = vld [vmem:[#allocation2 + $0x18] sm:$0xf]
    %v77 = vld [vmem:[#allocation2 + $0x1c] sm:$0xf]
    %v78 = vld [vmem:[#allocation2 + $0x20] sm:$0xf]
    %v79 = vld [vmem:[#allocation2 + $0x24] sm:$0xf]
    %v80 = vld [vmem:[#allocation2 + $0x28] sm:$0xf]
    %v81 = vld [vmem:[#allocation2 + $0x2c] sm:$0xf]
    %v82 = vld [vmem:[#allocation2 + $0x30] sm:$0xf]
    %v83 = vld [vmem:[#allocation2 + $0x34] sm:$0xf]
    %v84 = vld [vmem:[#allocation2 + $0x38] sm:$0xf]
    %v85 = vld [vmem:[#allocation2 + $0x3c] sm:$0xf]
    %v86 = vld [vmem:[%s1] sm:$0x1]
    %v88 = vlaneseq
    %v89 = vshrl.u32 %v88, 7
    %v90 = vsub.s32 0, %v89
    %v91 = vrot.slane %v86, %v90
    %v95 = vunpack.c.l.b16 %v68
    %v96 = vunpack.c.l.b16 %v69
    %v97 = vpack.c.b16 %v96, %v95
    %v115 = vunpack.c.l.b16 %v70
    %v116 = vunpack.c.l.b16 %v71
    %v117 = vunpack.c.l.b16 %v72
    %v118 = vunpack.c.l.b16 %v73
    %v119 = vunpack.c.l.b16 %v74
    %v120 = vunpack.c.l.b16 %v75
    %v121 = vunpack.c.l.b16 %v76
    %v122 = vunpack.c.l.b16 %v77
    %v123 = vunpack.c.l.b16 %v78
    %v124 = vunpack.c.l.b16 %v79
    %v125 = vunpack.c.l.b16 %v80
    %v126 = vunpack.c.l.b16 %v81
    %v127 = vunpack.c.l.b16 %v82
    %v128 = vunpack.c.l.b16 %v83
    %v129 = vunpack.c.l.b16 %v84
    %v130 = vunpack.c.l.b16 %v85
    %v131 = vpack.c.b16 %v116, %v115
    %v132 = vpack.c.b16 %v118, %v117
    %v133 = vpack.c.b16 %v120, %v119
    %v134 = vpack.c.b16 %v122, %v121
    %v135 = vpack.c.b16 %v124, %v123
    %v136 = vpack.c.b16 %v126, %v125
    %v137 = vpack.c.b16 %v128, %v127
    %v138 = vpack.c.b16 %v130, %v129
    %147 = vmatprep.subr.bf16.mxu0 0
    %148 = vmatpush1.bf16.msra.mxu0 %v138
    %149 = vmatprep.subr.bf16.mxu0 0
    %150 = vmatpush1.bf16.msra.mxu0 %v137
    %151 = vmatprep.subr.bf16.mxu0 0
    %152 = vmatpush1.bf16.msra.mxu0 %v136
    %153 = vmatprep.subr.bf16.mxu0 0
    %154 = vmatpush1.bf16.msra.mxu0 %v135
    %155 = vmatprep.subr.bf16.mxu0 0
    %156 = vmatpush1.bf16.msra.mxu0 %v134
    %157 = vmatprep.subr.bf16.mxu0 0
    %158 = vmatpush1.bf16.msra.mxu0 %v133
    %159 = vmatprep.subr.bf16.mxu0 0
    %160 = vmatpush1.bf16.msra.mxu0 %v132
    %161 = vmatprep.subr.bf16.mxu0 0
    %162 = vmatpush1.bf16.msra.mxu0 %v131
    %163 = vmatprep.subr.bf16.mxu0 0
    %164 = vmatpush2.bf16.msra.mxu0 0
    %165 = vmatprep.subr.bf16.mxu0 0
    %166 = vmatpush2.bf16.msra.mxu0 0
    %167 = vmatprep.subr.bf16.mxu0 0
    %168 = vmatpush2.bf16.msra.mxu0 0
    %169 = vmatprep.subr.bf16.mxu0 0
    %170 = vmatpush2.bf16.msra.mxu0 0
    %171 = vmatprep.subr.bf16.mxu0 0
    %172 = vmatpush2.bf16.msra.mxu0 0
    %173 = vmatprep.subr.bf16.mxu0 0
    %174 = vmatpush2.bf16.msra.mxu0 0
    %175 = vmatprep.subr.bf16.mxu0 0
    %176 = vmatpush2.bf16.msra.mxu0 0
    %177 = vmatprep.subr.bf16.mxu0 0
    %178 = vmatpush2.bf16.msra.mxu0 0
    %179 = vmatprep.mubr.bf16.mxu0 0
    %180 = vmatmul.mubr.bf16.gmra.mxu0 %v97
    %v181 = vpop.f32.mrf.mxu0
    %v182 = vadd.f32 %v91, %v181
    %v183 = vpop.f32.mrf.mxu0
    %v184 = vpop.f32.mrf.mxu0
    %v185 = vadd.f32 %v91, %v184
    %v186 = vpop.f32.mrf.mxu0
    %187 = vdwg.mxu0
    %vm188 = vcmp.ge.f32.partialorder %v182, 0.0
    %vm189 = vcmp.ge.f32.partialorder %v185, 0.0
    %v190 = vmul.f32 %v182, 0.4
    %v191 = vmul.f32 %v185, 0.4
    %v192 = vsel %vm188, %v182, %v190
    %v193 = vsel %vm189, %v185, %v191
    %v194 = vpack.c.bf16 %v193, %v192
    %v195 = vld [vmem:[#allocation4] sm:$0xf]
    %v196 = vld [vmem:[#allocation4 + $0x4] sm:$0xf]
    %v197 = vld [vmem:[#allocation4 + $0x8] sm:$0xf]
    %v198 = vld [vmem:[#allocation4 + $0xc] sm:$0xf]
    %v199 = vld [vmem:[#allocation4 + $0x10] sm:$0xf]
    %v200 = vld [vmem:[#allocation4 + $0x14] sm:$0xf]
    %v201 = vld [vmem:[#allocation4 + $0x18] sm:$0xf]
    %v202 = vld [vmem:[#allocation4 + $0x1c] sm:$0xf]
    %v203 = vld [vmem:[#allocation4 + $0x20] sm:$0xf]
    %v204 = vld [vmem:[#allocation4 + $0x24] sm:$0xf]
    %v205 = vld [vmem:[#allocation4 + $0x28] sm:$0xf]
    %v206 = vld [vmem:[#allocation4 + $0x2c] sm:$0xf]
    %v207 = vld [vmem:[#allocation4 + $0x30] sm:$0xf]
    %v208 = vld [vmem:[#allocation4 + $0x34] sm:$0xf]
    %v209 = vld [vmem:[#allocation4 + $0x38] sm:$0xf]
    %v210 = vld [vmem:[#allocation4 + $0x3c] sm:$0xf]
    %v211 = vld [vmem:[%s3] sm:$0x1]
    %v213 = vlaneseq
    %v214 = vshrl.u32 %v213, 7
    %v215 = vsub.s32 0, %v214
    %v216 = vrot.slane %v211, %v215
    %v234 = vunpack.c.l.b16 %v195
    %v235 = vunpack.c.l.b16 %v196
    %v236 = vunpack.c.l.b16 %v197
    %v237 = vunpack.c.l.b16 %v198
    %v238 = vunpack.c.l.b16 %v199
    %v239 = vunpack.c.l.b16 %v200
    %v240 = vunpack.c.l.b16 %v201
    %v241 = vunpack.c.l.b16 %v202
    %v242 = vunpack.c.l.b16 %v203
    %v243 = vunpack.c.l.b16 %v204
    %v244 = vunpack.c.l.b16 %v205
    %v245 = vunpack.c.l.b16 %v206
    %v246 = vunpack.c.l.b16 %v207
    %v247 = vunpack.c.l.b16 %v208
    %v248 = vunpack.c.l.b16 %v209
    %v249 = vunpack.c.l.b16 %v210
    %v250 = vpack.c.b16 %v235, %v234
    %v251 = vpack.c.b16 %v237, %v236
    %v252 = vpack.c.b16 %v239, %v238
    %v253 = vpack.c.b16 %v241, %v240
    %v254 = vpack.c.b16 %v243, %v242
    %v255 = vpack.c.b16 %v245, %v244
    %v256 = vpack.c.b16 %v247, %v246
    %v257 = vpack.c.b16 %v249, %v248
    %266 = vmatprep.subr.bf16.mxu0 0
    %267 = vmatpush1.bf16.msra.mxu0 %v257
    %268 = vmatprep.subr.bf16.mxu0 0
    %269 = vmatpush1.bf16.msra.mxu0 %v256
    %270 = vmatprep.subr.bf16.mxu0 0
    %271 = vmatpush1.bf16.msra.mxu0 %v255
    %272 = vmatprep.subr.bf16.mxu0 0
    %273 = vmatpush1.bf16.msra.mxu0 %v254
    %274 = vmatprep.subr.bf16.mxu0 0
    %275 = vmatpush1.bf16.msra.mxu0 %v253
    %276 = vmatprep.subr.bf16.mxu0 0
    %277 = vmatpush1.bf16.msra.mxu0 %v252
    %278 = vmatprep.subr.bf16.mxu0 0
    %279 = vmatpush1.bf16.msra.mxu0 %v251
    %280 = vmatprep.subr.bf16.mxu0 0
    %281 = vmatpush1.bf16.msra.mxu0 %v250
    %282 = vmatprep.subr.bf16.mxu0 0
    %283 = vmatpush2.bf16.msra.mxu0 0
    %284 = vmatprep.subr.bf16.mxu0 0
    %285 = vmatpush2.bf16.msra.mxu0 0
    %286 = vmatprep.subr.bf16.mxu0 0
    %287 = vmatpush2.bf16.msra.mxu0 0
    %288 = vmatprep.subr.bf16.mxu0 0
    %289 = vmatpush2.bf16.msra.mxu0 0
    %290 = vmatprep.subr.bf16.mxu0 0
    %291 = vmatpush2.bf16.msra.mxu0 0
    %292 = vmatprep.subr.bf16.mxu0 0
    %293 = vmatpush2.bf16.msra.mxu0 0
    %294 = vmatprep.subr.bf16.mxu0 0
    %295 = vmatpush2.bf16.msra.mxu0 0
    %296 = vmatprep.subr.bf16.mxu0 0
    %297 = vmatpush2.bf16.msra.mxu0 0
    %298 = vmatprep.mubr.bf16.mxu0 0
    %299 = vmatmul.mubr.bf16.gmra.mxu0 %v194
    %v300 = vpop.f32.mrf.mxu0
    %v301 = vadd.f32 %v216, %v300
    %v302 = vpop.f32.mrf.mxu0
    %v303 = vpop.f32.mrf.mxu0
    %v304 = vadd.f32 %v216, %v303
    %v305 = vpop.f32.mrf.mxu0
    %306 = vdwg.mxu0
    %vm307 = vcmp.ge.f32.partialorder %v301, 0.0
    %vm308 = vcmp.ge.f32.partialorder %v304, 0.0
    %v309 = vmul.f32 %v301, 0.4
    %v310 = vmul.f32 %v304, 0.4
    %v311 = vsel %vm307, %v301, %v309
    %v312 = vsel %vm308, %v304, %v310
    %v313 = vpack.c.bf16 %v312, %v311
    %v314 = vld [vmem:[#allocation6] sm:$0xf]
    %v315 = vld [vmem:[#allocation6 + $0x4] sm:$0xf]
    %v316 = vld [vmem:[#allocation6 + $0x8] sm:$0xf]
    %v317 = vld [vmem:[#allocation6 + $0xc] sm:$0xf]
    %v318 = vld [vmem:[#allocation6 + $0x10] sm:$0xf]
    %v319 = vld [vmem:[#allocation6 + $0x14] sm:$0xf]
    %v320 = vld [vmem:[#allocation6 + $0x18] sm:$0xf]
    %v321 = vld [vmem:[#allocation6 + $0x1c] sm:$0xf]
    %v322 = vld [vmem:[#allocation6 + $0x20] sm:$0xf]
    %v323 = vld [vmem:[#allocation6 + $0x24] sm:$0xf]
    %v324 = vld [vmem:[#allocation6 + $0x28] sm:$0xf]
    %v325 = vld [vmem:[#allocation6 + $0x2c] sm:$0xf]
    %v326 = vld [vmem:[#allocation6 + $0x30] sm:$0xf]
    %v327 = vld [vmem:[#allocation6 + $0x34] sm:$0xf]
    %v328 = vld [vmem:[#allocation6 + $0x38] sm:$0xf]
    %v329 = vld [vmem:[#allocation6 + $0x3c] sm:$0xf]
    %v330 = vld [vmem:[%s5] sm:$0x1]
    %v332 = vlaneseq
    %v333 = vshrl.u32 %v332, 7
    %v334 = vsub.s32 0, %v333
    %v335 = vrot.slane %v330, %v334
    %v353 = vunpack.c.l.b16 %v314
    %v354 = vunpack.c.l.b16 %v315
    %v355 = vunpack.c.l.b16 %v316
    %v356 = vunpack.c.l.b16 %v317
    %v357 = vunpack.c.l.b16 %v318
    %v358 = vunpack.c.l.b16 %v319
    %v359 = vunpack.c.l.b16 %v320
    %v360 = vunpack.c.l.b16 %v321
    %v361 = vunpack.c.l.b16 %v322
    %v362 = vunpack.c.l.b16 %v323
    %v363 = vunpack.c.l.b16 %v324
    %v364 = vunpack.c.l.b16 %v325
    %v365 = vunpack.c.l.b16 %v326
    %v366 = vunpack.c.l.b16 %v327
    %v367 = vunpack.c.l.b16 %v328
    %v368 = vunpack.c.l.b16 %v329
    %v369 = vpack.c.b16 %v354, %v353
    %v370 = vpack.c.b16 %v356, %v355
    %v371 = vpack.c.b16 %v358, %v357
    %v372 = vpack.c.b16 %v360, %v359
    %v373 = vpack.c.b16 %v362, %v361
    %v374 = vpack.c.b16 %v364, %v363
    %v375 = vpack.c.b16 %v366, %v365
    %v376 = vpack.c.b16 %v368, %v367
    %385 = vmatprep.subr.bf16.mxu0 0
    %386 = vmatpush1.bf16.msra.mxu0 %v376
    %387 = vmatprep.subr.bf16.mxu0 0
    %388 = vmatpush1.bf16.msra.mxu0 %v375
    %389 = vmatprep.subr.bf16.mxu0 0
    %390 = vmatpush1.bf16.msra.mxu0 %v374
    %391 = vmatprep.subr.bf16.mxu0 0
    %392 = vmatpush1.bf16.msra.mxu0 %v373
    %393 = vmatprep.subr.bf16.mxu0 0
    %394 = vmatpush1.bf16.msra.mxu0 %v372
    %395 = vmatprep.subr.bf16.mxu0 0
    %396 = vmatpush1.bf16.msra.mxu0 %v371
    %397 = vmatprep.subr.bf16.mxu0 0
    %398 = vmatpush1.bf16.msra.mxu0 %v370
    %399 = vmatprep.subr.bf16.mxu0 0
    %400 = vmatpush1.bf16.msra.mxu0 %v369
    %401 = vmatprep.subr.bf16.mxu0 0
    %402 = vmatpush2.bf16.msra.mxu0 0
    %403 = vmatprep.subr.bf16.mxu0 0
    %404 = vmatpush2.bf16.msra.mxu0 0
    %405 = vmatprep.subr.bf16.mxu0 0
    %406 = vmatpush2.bf16.msra.mxu0 0
    %407 = vmatprep.subr.bf16.mxu0 0
    %408 = vmatpush2.bf16.msra.mxu0 0
    %409 = vmatprep.subr.bf16.mxu0 0
    %410 = vmatpush2.bf16.msra.mxu0 0
    %411 = vmatprep.subr.bf16.mxu0 0
    %412 = vmatpush2.bf16.msra.mxu0 0
    %413 = vmatprep.subr.bf16.mxu0 0
    %414 = vmatpush2.bf16.msra.mxu0 0
    %415 = vmatprep.subr.bf16.mxu0 0
    %416 = vmatpush2.bf16.msra.mxu0 0
    %417 = vmatprep.mubr.bf16.mxu0 0
    %418 = vmatmul.mubr.bf16.gmra.mxu0 %v313
    %v419 = vpop.f32.mrf.mxu0
    %v420 = vadd.f32 %v335, %v419
    %v421 = vpop.f32.mrf.mxu0
    %v422 = vpop.f32.mrf.mxu0
    %v423 = vadd.f32 %v335, %v422
    %v424 = vpop.f32.mrf.mxu0
    %425 = vdwg.mxu0
    %v426 = vxor.u32 %v420, 2147483648
    %v427 = vxor.u32 %v423, 2147483648
    %v428 = vmul.f32 %v426, 1.442695
    %v429 = vpow.pop %v428
    %v430 = vmul.f32 %v427, 1.442695
    %v431 = vpow.pop %v430
    %v432 = vadd.f32 %v429, 1.0
    %v433 = vadd.f32 %v431, 1.0
    %v434 = vrcp.pop %v432
    %v435 = vmul.f32 1.0, %v434
    %v436 = vrcp.pop %v433
    %v437 = vmul.f32 1.0, %v436
    %438 = vst [vmem:[%s7] sm:$0xff] %v435
    %439 = vst [vmem:[%s7 + $0x8] sm:$0xff] %v437
    // Predicated region
    $region42: #{autoencoder_forward.1} parent=1 // pred_check
      _
    $region43: #{autoencoder_forward.1} parent=1 // pred_check_branch
      %441 = sbr.rel (0) target = $region45
    $region44: #{autoencoder_forward.1} parent=1 // pred_region
      _
    $region45: #{autoencoder_forward.1} parent=1 // pred_fallthru
      _
    // Predicated region
    $region46: #{autoencoder_forward.1} parent=1 // pred_check
      _
    $region47: #{autoencoder_forward.1} parent=1 // pred_check_branch
      %443 = sbr.rel (0) target = $region49
    $region48: #{autoencoder_forward.1} parent=1 // pred_region
      _
    $region49: #{autoencoder_forward.1} parent=1 // pred_fallthru
      _
    %444 = vsyncpa [#allocation3], 1
    %445 = vsyncpa [#allocation5], 1

</llo_original>
